<compile_context>
chip_gen: v5e
topology: v5e:2x2
jax: 0.10.0
libtpu: 0.0.40
codegen_flags: <defaults>
</compile_context>

<pallas_src>
from functools import partial

import jax
import jax.numpy as jnp
from jax.experimental import pallas as pl
from jax.experimental.pallas import tpu as pltpu

EPS = 1e-5

_VMEM_CAP = None


def _round_up(v, m):
    return ((v + m - 1) // m) * m


def _vmem_capacity_bytes():
    """Physical per-core VMEM, queried once (fallback: v7x's 64 MiB)."""
    global _VMEM_CAP
    if _VMEM_CAP is None:
        try:
            _VMEM_CAP = int(getattr(pltpu.get_tpu_info(), "vmem_capacity_bytes"))
        except Exception:
            _VMEM_CAP = 64 << 20
    return _VMEM_CAP


# ---------------------------------------------------------------------------
# Pallas kernel
# ---------------------------------------------------------------------------
def _make_kernel(L, M_real, M_pad, Med_p, Out_p, has_res, mm_dtype):
    inv_m = 1.0 / float(M_real)
    need_mask = (M_pad != M_real)

    def kernel(*refs):
        if has_res:
            (x_ref, w1_ref, g1_ref, be1_ref,
             w2_ref, g2_ref, be2_ref,
             w3_ref, g3_ref, be3_ref,
             br_ref, o_ref) = refs
        else:
            (x_ref, w1_ref, g1_ref, be1_ref,
             w2_ref, g2_ref, be2_ref,
             w3_ref, g3_ref, be3_ref, o_ref) = refs

        # Hoisted lane predicates, shared by every BN stage and the k=3 masks.
        lane = jax.lax.broadcasted_iota(jnp.int32, (1, M_pad), 1)
        valid = (lane < M_real) if need_mask else None     # (1, M_pad)
        pos = lane % L                                     # (1, M_pad)
        not_first = pos != 0                               # has a left neighbour
        not_last = pos != (L - 1)                          # has a right neighbour

        def mm(w, y):
            # MXU matmul; operands in mm_dtype, accumulate in f32.
            return jnp.dot(w, y.astype(mm_dtype),
                           preferred_element_type=jnp.float32)

        def bn_relu(y, g, b):
            # Train-mode BatchNorm over the lane (N*L) axis, one reduction
            # pass (sum + sumsq), fused affine + ReLU.
            ym = jnp.where(valid, y, 0.0) if need_mask else y
            s = jnp.sum(ym, axis=1, keepdims=True)
            ss = jnp.sum(ym * ym, axis=1, keepdims=True)
            mean = s * inv_m
            var = jnp.maximum(ss * inv_m - mean * mean, 0.0)
            a = g * jax.lax.rsqrt(var + EPS)
            bb = b - mean * a
            out = jnp.maximum(y * a + bb, 0.0)
            if need_mask:
                out = jnp.where(valid, out, 0.0)
            return out

        x = x_ref[...]                                     # (Cin_p, M_pad)

        # --- conv1 (1x1, stride handled in wrapper); residual 1x1 fused in ---
        y1r = mm(w1_ref[...], x)                           # (Med_p[+Out_p], M_pad)
        y1 = bn_relu(y1r[:Med_p], g1_ref[...], be1_ref[...])
        # Residual goes straight to the output slab (drops it from the live set).
        if has_res:
            o_ref[...] = y1r[Med_p:Med_p + Out_p] + br_ref[...]
        else:
            o_ref[...] = x.astype(jnp.float32)             # Cin_p == Out_p

        # --- conv2 (k=3, pad=1): taps stacked on the weight's output rows;
        #     roll + boundary-mask the tap OUTPUTS (no stacked activation). ---
        z = mm(w2_ref[...], y1)                            # (3*Med_p, M_pad)
        y2 = (z[Med_p:2 * Med_p]
              + jnp.where(not_first,
                          pltpu.roll(z[:Med_p], shift=1, axis=1), 0.0)
              + jnp.where(not_last,
                          pltpu.roll(z[2 * Med_p:], shift=M_pad - 1, axis=1), 0.0))
        y2 = bn_relu(y2, g2_ref[...], be2_ref[...])        # (Med_p, M_pad)

        # --- conv3 (1x1) ---
        y3 = bn_relu(mm(w3_ref[...], y2), g3_ref[...], be3_ref[...])

        o_ref[...] += y3

    return kernel


# ---------------------------------------------------------------------------
# Wrapper: NCL <-> (C, N*L) plumbing + pallas_call
# ---------------------------------------------------------------------------
@partial(jax.jit, static_argnames=("downsample", "mm_dtype"))
def bottleneck_forward(x, p, downsample=False, mm_dtype=jnp.float32):
    """x: (N, Cin, L) float32, PyTorch NCL layout."""
    stride = 2 if downsample else 1
    if stride != 1:
        # k=1 conv with stride == k=1 conv on strided input (both branches).
        x = x[:, :, ::stride]
    N, Cin, L = x.shape
    M = N * L
    M_pad = _round_up(M, 128)               # lane-dense slabs / stores
    Med = p["w1"].shape[0]
    Out = p["w3"].shape[0]
    has_res = p.get("wr") is not None

    # Sublane-aligned channel counts so in-kernel row splits are tile-aligned.
    Cin_p = _round_up(Cin, 8)
    Med_p = _round_up(Med, 8)
    Out_p = _round_up(Out, 8)

    # (N, Cin, L) -> channel-major slab (Cin_p, M_pad).
    # TODO(synk): fold this layout transform + pad into the kernel / BlockSpec
    # index_maps to cut wrapper-side HBM passes (matters most on v5e).
    x2 = jnp.transpose(x, (1, 0, 2)).reshape(Cin, M)
    x2 = jnp.pad(x2, ((0, Cin_p - Cin), (0, M_pad - M))).astype(mm_dtype)

    def padw(w, r, c):
        w = w.astype(jnp.float32)
        return jnp.pad(w, ((0, r - w.shape[0]), (0, c - w.shape[1])))

    def colp(v, r):
        v = v.astype(jnp.float32)
        return jnp.pad(v, (0, r - v.shape[0])).reshape(r, 1)

    # conv1 weight, with the residual 1x1 conv stacked underneath (one matmul).
    w1 = padw(p["w1"][:, :, 0], Med_p, Cin_p)
    if has_res:
        w1 = jnp.concatenate([w1, padw(p["wr"][:, :, 0], Out_p, Cin_p)], axis=0)

    # conv2 taps stacked on OUTPUT rows: [tap0; tap1; tap2] @ y1.
    w2 = jnp.concatenate([padw(p["w2"][:, :, k], Med_p, Med_p) for k in range(3)],
                         axis=0)                            # (3*Med_p, Med_p)
    w3 = padw(p["w3"][:, :, 0], Out_p, Med_p)

    args = [
        x2,
        w1.astype(mm_dtype), colp(p["g1"], Med_p), colp(p["be1"], Med_p),
        w2.astype(mm_dtype), colp(p["g2"], Med_p), colp(p["be2"], Med_p),
        w3.astype(mm_dtype), colp(p["g3"], Out_p), colp(p["be3"], Out_p),
    ]
    if has_res:
        args.append(colp(p["br"], Out_p))

    # --- VMEM budget: live-set estimate, capped at 7/8 of physical VMEM. ---
    xb = jnp.dtype(mm_dtype).itemsize
    est = M_pad * (Cin_p * xb                  # x slab
                   + (Med_p + Out_p) * 4       # y1r (conv1 + residual rows)
                   + 5 * Med_p * 4             # y1, z (3 taps), y2
                   + 2 * Out_p * 4)            # y3, output slab
    est += 2 << 20
    cap = (_vmem_capacity_bytes() * 7) // 8
    vmem_limit = int(min(max(32 << 20, 2 * est), cap))

    # --- Advisory cost estimate so XLA schedules around the call. ---
    flops = 2 * M_pad * ((Med_p + Out_p) * Cin_p + 3 * Med_p * Med_p
                         + Out_p * Med_p) + 12 * M_pad * (2 * Med_p + Out_p)
    bytes_accessed = sum(int(a.size) * a.dtype.itemsize for a in args) \
        + Out_p * M_pad * 4
    cost = pl.CostEstimate(flops=int(flops),
                           transcendentals=int(2 * Med_p + Out_p),
                           bytes_accessed=int(bytes_accessed))

    vmem = pl.BlockSpec(memory_space=pltpu.MemorySpace.VMEM)
    out2 = pl.pallas_call(
        _make_kernel(L, M, M_pad, Med_p, Out_p, has_res, mm_dtype),
        out_shape=jax.ShapeDtypeStruct((Out_p, M_pad), jnp.float32),
        in_specs=[vmem] * len(args),
        out_specs=vmem,
        compiler_params=pltpu.CompilerParams(vmem_limit_bytes=vmem_limit),
        cost_estimate=cost,
    )(*args)

    out2 = out2[:Out, :M]
    return jnp.transpose(out2.reshape(Out, N, L), (1, 0, 2))


# ---------------------------------------------------------------------------
# Pure-JAX reference (PyTorch semantics, NCL) for validation
# ---------------------------------------------------------------------------
def _conv1d_ref(x, w, b, stride=1, padding=0):
    out = jax.lax.conv_general_dilated(
        x, w, window_strides=(stride,), padding=[(padding, padding)],
        dimension_numbers=("NCH", "OIH", "NCH"))
    return out + b[None, :, None]


def _bn_relu_ref(x, gamma, beta):
    mu = jnp.mean(x, axis=(0, 2), keepdims=True)
    var = jnp.mean((x - mu) ** 2, axis=(0, 2), keepdims=True)
    y = (x - mu) / jnp.sqrt(var + EPS) * gamma[None, :, None] + beta[None, :, None]
    return jnp.maximum(y, 0.0)


def bottleneck_ref(x, p, downsample=False):
    stride = 2 if downsample else 1
    y = _conv1d_ref(x, p["w1"], p["b1"], stride=stride)
    y = _bn_relu_ref(y, p["g1"], p["be1"])
    y = _conv1d_ref(y, p["w2"], p["b2"], padding=1)
    y = _bn_relu_ref(y, p["g2"], p["be2"])
    y = _conv1d_ref(y, p["w3"], p["b3"])
    y = _bn_relu_ref(y, p["g3"], p["be3"])
    if p.get("wr") is not None:
        res = _conv1d_ref(x, p["wr"], p["br"], stride=stride)
    else:
        res = x
    return y + res


# ---------------------------------------------------------------------------
def init_params(key, Cin, Med, Out):
    ks = jax.random.split(key, 14)
    n = lambda k, s, scale=0.1: (scale * jax.random.normal(k, s)).astype(jnp.float32)
    p = {
        "w1": n(ks[0], (Med, Cin, 1)), "b1": n(ks[1], (Med,)),
        "g1": 1.0 + n(ks[2], (Med,)), "be1": n(ks[3], (Med,)),
        "w2": n(ks[4], (Med, Med, 3)), "b2": n(ks[5], (Med,)),
        "g2": 1.0 + n(ks[6], (Med,)), "be2": n(ks[7], (Med,)),
        "w3": n(ks[8], (Out, Med, 1)), "b3": n(ks[9], (Out,)),
        "g3": 1.0 + n(ks[10], (Out,)), "be3": n(ks[11], (Out,)),
    }
    if Cin != Out:
        p["wr"] = n(ks[12], (Out, Cin, 1))
        p["br"] = n(ks[13], (Out,))
    else:
        p["wr"] = None
        p["br"] = None
    return p


if __name__ == "__main__":
    key = jax.random.PRNGKey(0)
    N, L = 2, 16

    configs = [
        # (Cin, Med, Out, downsample, mm_dtype, tolerance)
        (4, 8, 16, False, jnp.float32, 1e-4),    # projection residual
        (4, 8, 16, True,  jnp.float32, 1e-4),    # projection residual, stride 2
        (16, 8, 16, False, jnp.float32, 1e-4),   # identity residual
        (4, 8, 16, False, jnp.bfloat16, 8e-2),   # bf16 MXU-operand fast path
    ]

    for idx, (Cin, Med, Out, ds, mmdt, tol) in enumerate(configs):
        kx, kp, key = jax.random.split(key, 3)
        x = jax.random.normal(kx, (N, Cin, L), jnp.float32)
        params = init_params(kp, Cin, Med, Out)

        out = bottleneck_forward(x, params, downsample=ds, mm_dtype=mmdt)
        jax.block_until_ready(out)
        ref = bottleneck_ref(x, params, downsample=ds)

        assert out.shape == ref.shape, (idx, out.shape, ref.shape)
        max_err = float(jnp.max(jnp.abs(out - ref)))
        assert max_err < tol, f"config {idx}: max abs err {max_err}"

    print("KERNEL_OK")
</pallas_src>

<mosaic_0001>
module attributes {stable_mosaic.version = 11 : i64} {
  func.func @kernel(%arg0: memref<8x128xf32, #tpu.memory_space<vmem>>, %arg1: memref<24x8xf32, #tpu.memory_space<vmem>>, %arg2: memref<8x1xf32, #tpu.memory_space<vmem>>, %arg3: memref<8x1xf32, #tpu.memory_space<vmem>>, %arg4: memref<24x8xf32, #tpu.memory_space<vmem>>, %arg5: memref<8x1xf32, #tpu.memory_space<vmem>>, %arg6: memref<8x1xf32, #tpu.memory_space<vmem>>, %arg7: memref<16x8xf32, #tpu.memory_space<vmem>>, %arg8: memref<16x1xf32, #tpu.memory_space<vmem>>, %arg9: memref<16x1xf32, #tpu.memory_space<vmem>>, %arg10: memref<16x1xf32, #tpu.memory_space<vmem>>, %arg11: memref<16x128xf32, #tpu.memory_space<vmem>>) attributes {dimension_semantics = [], scalar_prefetch = 0 : i64, scratch_operands = 0 : i64, tpu.core_type = #tpu.core_type<tc>} {
    %0 = tpu.iota {dimensions = array<i32: 1>} : vector<1x128xi32>
    %c32_i32 = arith.constant 32 : i32
    %1 = vector.broadcast %c32_i32 : i32 to vector<1x128xi32>
    %2 = arith.cmpi slt, %0, %1 : vector<1x128xi32>
    %c16_i32 = arith.constant 16 : i32
    %c0_i32 = arith.constant 0 : i32
    %3 = arith.cmpi eq, %c16_i32, %c0_i32 : i32
    %c1_i32 = arith.constant 1 : i32
    %4 = arith.select %3, %c1_i32, %c16_i32 : i32
    %5 = vector.broadcast %4 : i32 to vector<1x128xi32>
    %6 = arith.remsi %0, %5 : vector<1x128xi32>
    %c0_i32_0 = arith.constant 0 : i32
    %7 = vector.broadcast %c0_i32_0 : i32 to vector<1x128xi32>
    %8 = arith.cmpi ne, %6, %7 : vector<1x128xi32>
    %c0_i32_1 = arith.constant 0 : i32
    %9 = vector.broadcast %c0_i32_1 : i32 to vector<1x128xi32>
    %10 = arith.cmpi slt, %6, %9 : vector<1x128xi32>
    %c0_i32_2 = arith.constant 0 : i32
    %11 = arith.cmpi slt, %4, %c0_i32_2 : i32
    %12 = vector.broadcast %11 : i1 to vector<1x128xi1>
    %13 = vector.broadcast %12 : vector<1x128xi1> to vector<1x128xi1>
    %14 = arith.xori %10, %13 : vector<1x128xi1>
    %15 = arith.andi %14, %8 : vector<1x128xi1>
    %16 = vector.broadcast %4 : i32 to vector<1x128xi32>
    %17 = arith.addi %6, %16 : vector<1x128xi32>
    %18 = arith.select %15, %17, %6 : vector<1x128xi1>, vector<1x128xi32>
    %c0_i32_3 = arith.constant 0 : i32
    %19 = vector.broadcast %c0_i32_3 : i32 to vector<1x128xi32>
    %20 = arith.cmpi ne, %18, %19 : vector<1x128xi32>
    %c15_i32 = arith.constant 15 : i32
    %21 = vector.broadcast %c15_i32 : i32 to vector<1x128xi32>
    %22 = arith.cmpi ne, %18, %21 : vector<1x128xi32>
    %c0 = arith.constant 0 : index
    %c0_4 = arith.constant 0 : index
    %23 = vector.load %arg0[%c0, %c0_4] : memref<8x128xf32, #tpu.memory_space<vmem>>, vector<8x128xf32>
    %c0_5 = arith.constant 0 : index
    %c0_6 = arith.constant 0 : index
    %24 = vector.load %arg1[%c0_5, %c0_6] : memref<24x8xf32, #tpu.memory_space<vmem>>, vector<24x8xf32>
    %cst = arith.constant dense<0.000000e+00> : vector<24x128xf32>
    %25 = tpu.matmul %24, %23, %cst {dimension_numbers = #tpu.dot_dimension_numbers<[1], [0], [0], [1], [0, 0, 1, 1], [], []>} : vector<24x8xf32>, vector<8x128xf32>, vector<24x128xf32> -> vector<24x128xf32>
    %26 = vector.extract_strided_slice %25 {offsets = [0, 0], sizes = [8, 128], strides = [1, 1]} : vector<24x128xf32> to vector<8x128xf32>
    %c0_7 = arith.constant 0 : index
    %c0_8 = arith.constant 0 : index
    %27 = vector.load %arg2[%c0_7, %c0_8] : memref<8x1xf32, #tpu.memory_space<vmem>>, vector<8x1xf32>
    %c0_9 = arith.constant 0 : index
    %c0_10 = arith.constant 0 : index
    %28 = vector.load %arg3[%c0_9, %c0_10] : memref<8x1xf32, #tpu.memory_space<vmem>>, vector<8x1xf32>
    %cst_11 = arith.constant 0.000000e+00 : f32
    %29 = vector.shape_cast %2 : vector<1x128xi1> to vector<1x128xi1>
    %30 = vector.broadcast %29 : vector<1x128xi1> to vector<8x128xi1>
    %31 = vector.broadcast %cst_11 : f32 to vector<8x128xf32>
    %32 = arith.select %30, %26, %31 : vector<8x128xi1>, vector<8x128xf32>
    %cst_12 = arith.constant dense<0.000000e+00> : vector<8xf32>
    %33 = vector.multi_reduction <add>, %32, %cst_12 [1] : vector<8x128xf32> to vector<8xf32>
    %34 = vector.shape_cast %33 : vector<8xf32> to vector<8x1xf32>
    %35 = arith.mulf %32, %32 : vector<8x128xf32>
    %cst_13 = arith.constant dense<0.000000e+00> : vector<8xf32>
    %36 = vector.multi_reduction <add>, %35, %cst_13 [1] : vector<8x128xf32> to vector<8xf32>
    %37 = vector.shape_cast %36 : vector<8xf32> to vector<8x1xf32>
    %cst_14 = arith.constant 3.125000e-02 : f32
    %38 = vector.broadcast %cst_14 : f32 to vector<8x1xf32>
    %39 = arith.mulf %34, %38 : vector<8x1xf32>
    %cst_15 = arith.constant 3.125000e-02 : f32
    %40 = vector.broadcast %cst_15 : f32 to vector<8x1xf32>
    %41 = arith.mulf %37, %40 : vector<8x1xf32>
    %42 = arith.mulf %39, %39 : vector<8x1xf32>
    %43 = arith.subf %41, %42 : vector<8x1xf32>
    %cst_16 = arith.constant 0.000000e+00 : f32
    %44 = vector.broadcast %cst_16 : f32 to vector<8x1xf32>
    %45 = arith.maximumf %43, %44 : vector<8x1xf32>
    %cst_17 = arith.constant 9.99999974E-6 : f32
    %46 = vector.broadcast %cst_17 : f32 to vector<8x1xf32>
    %47 = arith.addf %45, %46 : vector<8x1xf32>
    %48 = math.rsqrt %47 : vector<8x1xf32>
    %49 = arith.mulf %27, %48 : vector<8x1xf32>
    %50 = arith.mulf %39, %49 : vector<8x1xf32>
    %51 = arith.subf %28, %50 : vector<8x1xf32>
    %52 = vector.broadcast %49 : vector<8x1xf32> to vector<8x128xf32>
    %53 = arith.mulf %26, %52 : vector<8x128xf32>
    %54 = vector.broadcast %51 : vector<8x1xf32> to vector<8x128xf32>
    %55 = arith.addf %53, %54 : vector<8x128xf32>
    %cst_18 = arith.constant 0.000000e+00 : f32
    %56 = vector.broadcast %cst_18 : f32 to vector<8x128xf32>
    %57 = arith.maximumf %55, %56 : vector<8x128xf32>
    %cst_19 = arith.constant 0.000000e+00 : f32
    %58 = vector.shape_cast %2 : vector<1x128xi1> to vector<1x128xi1>
    %59 = vector.broadcast %58 : vector<1x128xi1> to vector<8x128xi1>
    %60 = vector.broadcast %cst_19 : f32 to vector<8x128xf32>
    %61 = arith.select %59, %57, %60 : vector<8x128xi1>, vector<8x128xf32>
    %62 = vector.extract_strided_slice %25 {offsets = [8, 0], sizes = [16, 128], strides = [1, 1]} : vector<24x128xf32> to vector<16x128xf32>
    %c0_20 = arith.constant 0 : index
    %c0_21 = arith.constant 0 : index
    %63 = vector.load %arg10[%c0_20, %c0_21] : memref<16x1xf32, #tpu.memory_space<vmem>>, vector<16x1xf32>
    %64 = vector.broadcast %63 : vector<16x1xf32> to vector<16x128xf32>
    %65 = arith.addf %62, %64 : vector<16x128xf32>
    %c0_22 = arith.constant 0 : index
    %c0_23 = arith.constant 0 : index
    %66 = vector.load %arg11[%c0_22, %c0_23] : memref<16x128xf32, #tpu.memory_space<vmem>>, vector<16x128xf32>
    tpu.vector_store %arg11[%c0_22, %c0_23], %65 {strides = array<i32>} : memref<16x128xf32, #tpu.memory_space<vmem>>, vector<16x128xf32>,
    %c0_24 = arith.constant 0 : index
    %c0_25 = arith.constant 0 : index
    %67 = vector.load %arg4[%c0_24, %c0_25] : memref<24x8xf32, #tpu.memory_space<vmem>>, vector<24x8xf32>
    %cst_26 = arith.constant dense<0.000000e+00> : vector<24x128xf32>
    %68 = tpu.matmul %67, %61, %cst_26 {dimension_numbers = #tpu.dot_dimension_numbers<[1], [0], [0], [1], [0, 0, 1, 1], [], []>} : vector<24x8xf32>, vector<8x128xf32>, vector<24x128xf32> -> vector<24x128xf32>
    %69 = vector.extract_strided_slice %68 {offsets = [8, 0], sizes = [8, 128], strides = [1, 1]} : vector<24x128xf32> to vector<8x128xf32>
    %70 = vector.extract_strided_slice %68 {offsets = [0, 0], sizes = [8, 128], strides = [1, 1]} : vector<24x128xf32> to vector<8x128xf32>
    %c1_i32_27 = arith.constant 1 : i32
    %71 = tpu.dynamic_rotate %70 by %c1_i32_27 dim 1 : vector<8x128xf32>, i32 -> vector<8x128xf32>
    %cst_28 = arith.constant 0.000000e+00 : f32
    %72 = vector.shape_cast %20 : vector<1x128xi1> to vector<1x128xi1>
    %73 = vector.broadcast %72 : vector<1x128xi1> to vector<8x128xi1>
    %74 = vector.broadcast %cst_28 : f32 to vector<8x128xf32>
    %75 = arith.select %73, %71, %74 : vector<8x128xi1>, vector<8x128xf32>
    %76 = arith.addf %69, %75 : vector<8x128xf32>
    %77 = vector.extract_strided_slice %68 {offsets = [16, 0], sizes = [8, 128], strides = [1, 1]} : vector<24x128xf32> to vector<8x128xf32>
    %c127_i32 = arith.constant 127 : i32
    %78 = tpu.dynamic_rotate %77 by %c127_i32 dim 1 : vector<8x128xf32>, i32 -> vector<8x128xf32>
    %cst_29 = arith.constant 0.000000e+00 : f32
    %79 = vector.shape_cast %22 : vector<1x128xi1> to vector<1x128xi1>
    %80 = vector.broadcast %79 : vector<1x128xi1> to vector<8x128xi1>
    %81 = vector.broadcast %cst_29 : f32 to vector<8x128xf32>
    %82 = arith.select %80, %78, %81 : vector<8x128xi1>, vector<8x128xf32>
    %83 = arith.addf %76, %82 : vector<8x128xf32>
    %c0_30 = arith.constant 0 : index
    %c0_31 = arith.constant 0 : index
    %84 = vector.load %arg5[%c0_30, %c0_31] : memref<8x1xf32, #tpu.memory_space<vmem>>, vector<8x1xf32>
    %c0_32 = arith.constant 0 : index
    %c0_33 = arith.constant 0 : index
    %85 = vector.load %arg6[%c0_32, %c0_33] : memref<8x1xf32, #tpu.memory_space<vmem>>, vector<8x1xf32>
    %cst_34 = arith.constant 0.000000e+00 : f32
    %86 = vector.shape_cast %2 : vector<1x128xi1> to vector<1x128xi1>
    %87 = vector.broadcast %86 : vector<1x128xi1> to vector<8x128xi1>
    %88 = vector.broadcast %cst_34 : f32 to vector<8x128xf32>
    %89 = arith.select %87, %83, %88 : vector<8x128xi1>, vector<8x128xf32>
    %cst_35 = arith.constant dense<0.000000e+00> : vector<8xf32>
    %90 = vector.multi_reduction <add>, %89, %cst_35 [1] : vector<8x128xf32> to vector<8xf32>
    %91 = vector.shape_cast %90 : vector<8xf32> to vector<8x1xf32>
    %92 = arith.mulf %89, %89 : vector<8x128xf32>
    %cst_36 = arith.constant dense<0.000000e+00> : vector<8xf32>
    %93 = vector.multi_reduction <add>, %92, %cst_36 [1] : vector<8x128xf32> to vector<8xf32>
    %94 = vector.shape_cast %93 : vector<8xf32> to vector<8x1xf32>
    %cst_37 = arith.constant 3.125000e-02 : f32
    %95 = vector.broadcast %cst_37 : f32 to vector<8x1xf32>
    %96 = arith.mulf %91, %95 : vector<8x1xf32>
    %cst_38 = arith.constant 3.125000e-02 : f32
    %97 = vector.broadcast %cst_38 : f32 to vector<8x1xf32>
    %98 = arith.mulf %94, %97 : vector<8x1xf32>
    %99 = arith.mulf %96, %96 : vector<8x1xf32>
    %100 = arith.subf %98, %99 : vector<8x1xf32>
    %cst_39 = arith.constant 0.000000e+00 : f32
    %101 = vector.broadcast %cst_39 : f32 to vector<8x1xf32>
    %102 = arith.maximumf %100, %101 : vector<8x1xf32>
    %cst_40 = arith.constant 9.99999974E-6 : f32
    %103 = vector.broadcast %cst_40 : f32 to vector<8x1xf32>
    %104 = arith.addf %102, %103 : vector<8x1xf32>
    %105 = math.rsqrt %104 : vector<8x1xf32>
    %106 = arith.mulf %84, %105 : vector<8x1xf32>
    %107 = arith.mulf %96, %106 : vector<8x1xf32>
    %108 = arith.subf %85, %107 : vector<8x1xf32>
    %109 = vector.broadcast %106 : vector<8x1xf32> to vector<8x128xf32>
    %110 = arith.mulf %83, %109 : vector<8x128xf32>
    %111 = vector.broadcast %108 : vector<8x1xf32> to vector<8x128xf32>
    %112 = arith.addf %110, %111 : vector<8x128xf32>
    %cst_41 = arith.constant 0.000000e+00 : f32
    %113 = vector.broadcast %cst_41 : f32 to vector<8x128xf32>
    %114 = arith.maximumf %112, %113 : vector<8x128xf32>
    %cst_42 = arith.constant 0.000000e+00 : f32
    %115 = vector.shape_cast %2 : vector<1x128xi1> to vector<1x128xi1>
    %116 = vector.broadcast %115 : vector<1x128xi1> to vector<8x128xi1>
    %117 = vector.broadcast %cst_42 : f32 to vector<8x128xf32>
    %118 = arith.select %116, %114, %117 : vector<8x128xi1>, vector<8x128xf32>
    %c0_43 = arith.constant 0 : index
    %c0_44 = arith.constant 0 : index
    %119 = vector.load %arg7[%c0_43, %c0_44] : memref<16x8xf32, #tpu.memory_space<vmem>>, vector<16x8xf32>
    %cst_45 = arith.constant dense<0.000000e+00> : vector<16x128xf32>
    %120 = tpu.matmul %119, %118, %cst_45 {dimension_numbers = #tpu.dot_dimension_numbers<[1], [0], [0], [1], [0, 0, 1, 1], [], []>} : vector<16x8xf32>, vector<8x128xf32>, vector<16x128xf32> -> vector<16x128xf32>
    %c0_46 = arith.constant 0 : index
    %c0_47 = arith.constant 0 : index
    %121 = vector.load %arg8[%c0_46, %c0_47] : memref<16x1xf32, #tpu.memory_space<vmem>>, vector<16x1xf32>
    %c0_48 = arith.constant 0 : index
    %c0_49 = arith.constant 0 : index
    %122 = vector.load %arg9[%c0_48, %c0_49] : memref<16x1xf32, #tpu.memory_space<vmem>>, vector<16x1xf32>
    %cst_50 = arith.constant 0.000000e+00 : f32
    %123 = vector.shape_cast %2 : vector<1x128xi1> to vector<1x128xi1>
    %124 = vector.broadcast %123 : vector<1x128xi1> to vector<16x128xi1>
    %125 = vector.broadcast %cst_50 : f32 to vector<16x128xf32>
    %126 = arith.select %124, %120, %125 : vector<16x128xi1>, vector<16x128xf32>
    %cst_51 = arith.constant dense<0.000000e+00> : vector<16xf32>
    %127 = vector.multi_reduction <add>, %126, %cst_51 [1] : vector<16x128xf32> to vector<16xf32>
    %128 = vector.shape_cast %127 : vector<16xf32> to vector<16x1xf32>
    %129 = arith.mulf %126, %126 : vector<16x128xf32>
    %cst_52 = arith.constant dense<0.000000e+00> : vector<16xf32>
    %130 = vector.multi_reduction <add>, %129, %cst_52 [1] : vector<16x128xf32> to vector<16xf32>
    %131 = vector.shape_cast %130 : vector<16xf32> to vector<16x1xf32>
    %cst_53 = arith.constant 3.125000e-02 : f32
    %132 = vector.broadcast %cst_53 : f32 to vector<16x1xf32>
    %133 = arith.mulf %128, %132 : vector<16x1xf32>
    %cst_54 = arith.constant 3.125000e-02 : f32
    %134 = vector.broadcast %cst_54 : f32 to vector<16x1xf32>
    %135 = arith.mulf %131, %134 : vector<16x1xf32>
    %136 = arith.mulf %133, %133 : vector<16x1xf32>
    %137 = arith.subf %135, %136 : vector<16x1xf32>
    %cst_55 = arith.constant 0.000000e+00 : f32
    %138 = vector.broadcast %cst_55 : f32 to vector<16x1xf32>
    %139 = arith.maximumf %137, %138 : vector<16x1xf32>
    %cst_56 = arith.constant 9.99999974E-6 : f32
    %140 = vector.broadcast %cst_56 : f32 to vector<16x1xf32>
    %141 = arith.addf %139, %140 : vector<16x1xf32>
    %142 = math.rsqrt %141 : vector<16x1xf32>
    %143 = arith.mulf %121, %142 : vector<16x1xf32>
    %144 = arith.mulf %133, %143 : vector<16x1xf32>
    %145 = arith.subf %122, %144 : vector<16x1xf32>
    %146 = vector.broadcast %143 : vector<16x1xf32> to vector<16x128xf32>
    %147 = arith.mulf %120, %146 : vector<16x128xf32>
    %148 = vector.broadcast %145 : vector<16x1xf32> to vector<16x128xf32>
    %149 = arith.addf %147, %148 : vector<16x128xf32>
    %cst_57 = arith.constant 0.000000e+00 : f32
    %150 = vector.broadcast %cst_57 : f32 to vector<16x128xf32>
    %151 = arith.maximumf %149, %150 : vector<16x128xf32>
    %cst_58 = arith.constant 0.000000e+00 : f32
    %152 = vector.shape_cast %2 : vector<1x128xi1> to vector<1x128xi1>
    %153 = vector.broadcast %152 : vector<1x128xi1> to vector<16x128xi1>
    %154 = vector.broadcast %cst_58 : f32 to vector<16x128xf32>
    %155 = arith.select %153, %151, %154 : vector<16x128xi1>, vector<16x128xf32>
    %c0_59 = arith.constant 0 : index
    %c0_60 = arith.constant 0 : index
    %156 = vector.load %arg11[%c0_59, %c0_60] : memref<16x128xf32, #tpu.memory_space<vmem>>, vector<16x128xf32>
    %157 = arith.addf %156, %155 : vector<16x128xf32>
    %c0_61 = arith.constant 0 : index
    %c0_62 = arith.constant 0 : index
    %158 = vector.load %arg11[%c0_61, %c0_62] : memref<16x128xf32, #tpu.memory_space<vmem>>, vector<16x128xf32>
    tpu.vector_store %arg11[%c0_61, %c0_62], %157 {strides = array<i32>} : memref<16x128xf32, #tpu.memory_space<vmem>>, vector<16x128xf32>,
    return
  }
}

</mosaic_0001>

<llo_original>
// kernel: bottleneck_forward.1
$region0: #{bottleneck_forward.1}
  #allocation0 [shape = 'u32[]', space=smem, size = 0x4, offset = 0x4, fixed_abs, tag = 'smem constant byte address 0x4 - core index']
  #allocation1 [shape = 'u32[72,128]{1,0:T(1,128)}', space=vmem, size = 0x9000, scoped, tag = 'internal scratch']
  %s0 = inlined_call_operand.vmem [shape: f32[8,128], index: 0, kind: input, shape index: {}]
  %s1 = inlined_call_operand.vmem [shape: f32[24,8], index: 1, kind: input, shape index: {}]
  %s2 = inlined_call_operand.vmem [shape: f32[8,1], index: 2, kind: input, shape index: {}]
  %s3 = inlined_call_operand.vmem [shape: f32[8,1], index: 3, kind: input, shape index: {}]
  %s4 = inlined_call_operand.vmem [shape: f32[24,8], index: 4, kind: input, shape index: {}]
  %s5 = inlined_call_operand.vmem [shape: f32[8,1], index: 5, kind: input, shape index: {}]
  %s6 = inlined_call_operand.vmem [shape: f32[8,1], index: 6, kind: input, shape index: {}]
  %s7 = inlined_call_operand.vmem [shape: f32[16,8], index: 7, kind: input, shape index: {}]
  %s8 = inlined_call_operand.vmem [shape: f32[16,1], index: 8, kind: input, shape index: {}]
  %s9 = inlined_call_operand.vmem [shape: f32[16,1], index: 9, kind: input, shape index: {}]
  %s10 = inlined_call_operand.vmem [shape: f32[16,1], index: 10, kind: input, shape index: {}]
  %s11 = inlined_call_operand.vmem [shape: f32[16,128], index: 11, kind: output, shape index: {}]
  %s12 = sld [smem:[#allocation0]]
  $region54: #{bottleneck_forward.1} parent=0
    _
  %s14 = ssub.s32 1, %s12
  %s15 = scalar_select 0, %s14, %s12
  // Predicated region
  $region2: #{bottleneck_forward.1} parent=0 // pred_check
    _
  $region3: #{bottleneck_forward.1} parent=0 // pred_check_branch
    %17 = sbr.rel (0) target = $region5
  $region4: #{bottleneck_forward.1} parent=0 // pred_region
    _
  $region5: #{bottleneck_forward.1} parent=0 // pred_fallthru
    _
  // Predicated region
  $region6: #{bottleneck_forward.1} parent=0 // pred_check
    _
  $region7: #{bottleneck_forward.1} parent=0 // pred_check_branch
    %19 = sbr.rel (0) target = $region9
  $region8: #{bottleneck_forward.1} parent=0 // pred_region
    _
  $region9: #{bottleneck_forward.1} parent=0 // pred_fallthru
    _
  // Predicated region
  $region10: #{bottleneck_forward.1} parent=0 // pred_check
    _
  $region11: #{bottleneck_forward.1} parent=0 // pred_check_branch
    %21 = sbr.rel (0) target = $region13
  $region12: #{bottleneck_forward.1} parent=0 // pred_region
    _
  $region13: #{bottleneck_forward.1} parent=0 // pred_fallthru
    _
  // Predicated region
  $region14: #{bottleneck_forward.1} parent=0 // pred_check
    _
  $region15: #{bottleneck_forward.1} parent=0 // pred_check_branch
    %23 = sbr.rel (0) target = $region17
  $region16: #{bottleneck_forward.1} parent=0 // pred_region
    _
  $region17: #{bottleneck_forward.1} parent=0 // pred_fallthru
    _
  // Predicated region
  $region18: #{bottleneck_forward.1} parent=0 // pred_check
    _
  $region19: #{bottleneck_forward.1} parent=0 // pred_check_branch
    %25 = sbr.rel (0) target = $region21
  $region20: #{bottleneck_forward.1} parent=0 // pred_region
    _
  $region21: #{bottleneck_forward.1} parent=0 // pred_fallthru
    _
  // Predicated region
  $region22: #{bottleneck_forward.1} parent=0 // pred_check
    _
  $region23: #{bottleneck_forward.1} parent=0 // pred_check_branch
    %27 = sbr.rel (0) target = $region25
  $region24: #{bottleneck_forward.1} parent=0 // pred_region
    _
  $region25: #{bottleneck_forward.1} parent=0 // pred_fallthru
    _
  // Predicated region
  $region26: #{bottleneck_forward.1} parent=0 // pred_check
    _
  $region27: #{bottleneck_forward.1} parent=0 // pred_check_branch
    %29 = sbr.rel (0) target = $region29
  $region28: #{bottleneck_forward.1} parent=0 // pred_region
    _
  $region29: #{bottleneck_forward.1} parent=0 // pred_fallthru
    _
  // Predicated region
  $region30: #{bottleneck_forward.1} parent=0 // pred_check
    _
  $region31: #{bottleneck_forward.1} parent=0 // pred_check_branch
    %31 = sbr.rel (0) target = $region33
  $region32: #{bottleneck_forward.1} parent=0 // pred_region
    _
  $region33: #{bottleneck_forward.1} parent=0 // pred_fallthru
    _
  // Predicated region
  $region34: #{bottleneck_forward.1} parent=0 // pred_check
    _
  $region35: #{bottleneck_forward.1} parent=0 // pred_check_branch
    %33 = sbr.rel (0) target = $region37
  $region36: #{bottleneck_forward.1} parent=0 // pred_region
    _
  $region37: #{bottleneck_forward.1} parent=0 // pred_fallthru
    _
  // Predicated region
  $region38: #{bottleneck_forward.1} parent=0 // pred_check
    _
  $region39: #{bottleneck_forward.1} parent=0 // pred_check_branch
    %35 = sbr.rel (0) target = $region41
  $region40: #{bottleneck_forward.1} parent=0 // pred_region
    _
  $region41: #{bottleneck_forward.1} parent=0 // pred_fallthru
    _
  // Predicated region
  $region42: #{bottleneck_forward.1} parent=0 // pred_check
    _
  $region43: #{bottleneck_forward.1} parent=0 // pred_check_branch
    %37 = sbr.rel (0) target = $region45
  $region44: #{bottleneck_forward.1} parent=0 // pred_region
    _
  $region45: #{bottleneck_forward.1} parent=0 // pred_fallthru
    _
  %v38 = vlaneseq
  %v39 = vand.u32 %v38, 127
  %vm40 = vcmp.lt.s32.totalorder %v39, 32
  %vm41 = vcmp.lt.s32.totalorder %v39, 0
  %v42 = vsub.s32 0, %v39
  %v43 = vsel %vm41, %v42, %v39
  %v44 = vshrl.u32 %v43, 4
  %v45 = vand.u32 %v43, 15
  %v46 = vsub.s32 0, %v45
  %v47 = vsel %vm41, %v46, %v45
  %vm48 = vcmp.ne.s32.totalorder %v47, 0
  %vm49 = vcmp.lt.s32.totalorder %v47, 0
  %vm50 = vmand %vm49, %vm48
  %v51 = vadd.s32 %v47, 16
  %v52 = vsel %vm50, %v51, %v47
  %vm53 = vcmp.ne.s32.totalorder %v52, 0
  %vm54 = vcmp.ne.s32.totalorder %v52, 15
  %v55 = vld [vmem:[%s0] sm:$0xff]
  %v56 = vld [vmem:[%s1] sm:$0xff]
  %v57 = vld [vmem:[%s1 + $0x8] sm:$0xff]
  %v58 = vld [vmem:[%s1 + $0x10] sm:$0xff]
  %vm59 = vcmask 64512
  %v61 = vsel %vm59, %v56, 0
  %v64 = vsel %vm59, %v57, 0
  %v67 = vsel %vm59, %v58, 0
  %69 = vmatpush.msra.mxu0 0.0
  %70 = vmatpush.msra.mxu0 0.0
  %71 = vmatpush.msra.mxu0 0.0
  %72 = vmatpush.msra.mxu0 0.0
  %73 = vmatpush.msra.mxu0 0.0
  %74 = vmatpush.msra.mxu0 0.0
  %75 = vmatpush.msra.mxu0 0.0
  %76 = vmatpush.msra.mxu0 0.0
  %77 = vmatpush.msra.mxu0 0.0
  %78 = vmatpush.msra.mxu0 0.0
  %79 = vmatpush.msra.mxu0 0.0
  %80 = vmatpush.msra.mxu0 0.0
  %81 = vmatpush.msra.mxu0 0.0
  %82 = vmatpush.msra.mxu0 0.0
  %83 = vmatpush.msra.mxu0 0.0
  %84 = vmatpush.msra.mxu0 %v55
  %85 = vmatmul.f32.gmra.mxu0 %v61
  %v86 = vpop.f32.mrf.mxu0
  %v87 = vadd.f32 0.0, %v86
  %88 = vmatmul.f32.gmra.mxu0 %v64
  %v89 = vpop.f32.mrf.mxu0
  %v90 = vadd.f32 0.0, %v89
  %91 = vmatmul.f32.gmra.mxu0 %v67
  %v92 = vpop.f32.mrf.mxu0
  %v93 = vadd.f32 0.0, %v92
  %94 = vdwg.mxu0
  %v95 = vld [vmem:[%s2] sm:$0xff]
  %v96 = vld [vmem:[%s3] sm:$0xff]
  %v97 = vsel %vm40, 1, 0
  %vm98 = vcmp.eq.s32.totalorder %v97, 1
  %v99 = vsel %vm98, %v87, 0.0
  %100 = vadd.xlane.f32.xlu0 %v99
  %v101 = vpop.xlane.xlu0 %100
  %v102 = vmul.f32 %v99, %v99
  %103 = vadd.xlane.f32.xlu0 %v102
  %v104 = vpop.xlane.xlu0 %103
  %v105 = vmul.f32 %v101, 0.03125
  %v106 = vmul.f32 %v104, 0.03125
  %v107 = vmul.f32 %v105, %v105
  %v108 = vsub.f32 %v106, %v107
  %v109 = vmax.f32 %v108, 0.0
  %v110 = vadd.f32 %v109, 1e-05
  %v111 = vrsqrt.pop %v110
  %v112 = vmul.f32 %v111, %v110
  %v113 = vmul.f32 %v112, %v111
  %v114 = vmul.f32 0.5, %v113
  %v115 = vsub.f32 1.5, %v114
  %v116 = vmul.f32 %v111, %v115
  %vm117 = vweird.f32 %v110
  %vm118 = vweird.f32 %v111
  %vm119 = vmor %vm117, %vm118
  %v120 = vsel %vm119, %v111, %v116
  %v121 = vmul.f32 %v95, %v120
  %v122 = vmul.f32 %v105, %v121
  %v123 = vsub.f32 %v96, %v122
  %125 = vset.pattern.permute.xlu0 0
  %126 = vperm.xlu0 %125, %v121
  %v127 = vpop.permute.xlu0 %126
  %v129 = vmul.f32 %v87, %v127
  %131 = vset.pattern.permute.xlu0 0
  %132 = vperm.xlu0 %131, %v123
  %v133 = vpop.permute.xlu0 %132
  %v135 = vadd.f32 %v129, %v133
  %v136 = vmax.f32 %v135, 0.0
  %v137 = vsel %vm98, %v136, 0.0
  %v138 = vld [vmem:[%s10] sm:$0xff]
  %v139 = vld [vmem:[%s10 + $0x8] sm:$0xff]
  %141 = vset.pattern.permute.xlu0 0
  %142 = vperm.xlu0 %141, %v138
  %v143 = vpop.permute.xlu0 %142
  %146 = vset.pattern.permute.xlu0 0
  %147 = vperm.xlu0 %146, %v139
  %v148 = vpop.permute.xlu0 %147
  %v150 = vadd.f32 %v90, %v143
  %v151 = vadd.f32 %v93, %v148
  %152 = vst [vmem:[%s11] sm:$0xff] %v150
  %153 = vst [vmem:[%s11 + $0x8] sm:$0xff] %v151
  %v154 = vld [vmem:[%s4] sm:$0xff]
  %v155 = vld [vmem:[%s4 + $0x8] sm:$0xff]
  %v156 = vld [vmem:[%s4 + $0x10] sm:$0xff]
  %v158 = vsel %vm59, %v154, 0
  %v161 = vsel %vm59, %v155, 0
  %v164 = vsel %vm59, %v156, 0
  %166 = vmatpush.msra.mxu0 0.0
  %167 = vmatpush.msra.mxu0 0.0
  %168 = vmatpush.msra.mxu0 0.0
  %169 = vmatpush.msra.mxu0 0.0
  %170 = vmatpush.msra.mxu0 0.0
  %171 = vmatpush.msra.mxu0 0.0
  %172 = vmatpush.msra.mxu0 0.0
  %173 = vmatpush.msra.mxu0 0.0
  %174 = vmatpush.msra.mxu0 0.0
  %175 = vmatpush.msra.mxu0 0.0
  %176 = vmatpush.msra.mxu0 0.0
  %177 = vmatpush.msra.mxu0 0.0
  %178 = vmatpush.msra.mxu0 0.0
  %179 = vmatpush.msra.mxu0 0.0
  %180 = vmatpush.msra.mxu0 0.0
  %181 = vmatpush.msra.mxu0 %v137
  %182 = vmatmul.f32.gmra.mxu0 %v158
  %v183 = vpop.f32.mrf.mxu0
  %v184 = vadd.f32 0.0, %v183
  %185 = vmatmul.f32.gmra.mxu0 %v161
  %v186 = vpop.f32.mrf.mxu0
  %v187 = vadd.f32 0.0, %v186
  %188 = vmatmul.f32.gmra.mxu0 %v164
  %v189 = vpop.f32.mrf.mxu0
  %v190 = vadd.f32 0.0, %v189
  %191 = vdwg.mxu0
  %192 = vrot.lane.b32.xlu0 %v184, 1
  %v193 = vpop.permute.xlu0 %192
  %v194 = vsel %vm53, 1, 0
  %vm195 = vcmp.eq.s32.totalorder %v194, 1
  %v196 = vsel %vm195, %v193, 0.0
  %v197 = vadd.f32 %v187, %v196
  %198 = vrot.lane.b32.xlu0 %v190, 127
  %v199 = vpop.permute.xlu0 %198
  %v200 = vsel %vm54, 1, 0
  %vm201 = vcmp.eq.s32.totalorder %v200, 1
  %v202 = vsel %vm201, %v199, 0.0
  %v203 = vadd.f32 %v197, %v202
  %v204 = vld [vmem:[%s5] sm:$0xff]
  %v205 = vld [vmem:[%s6] sm:$0xff]
  %v206 = vsel %vm98, %v203, 0.0
  %207 = vadd.xlane.f32.xlu0 %v206
  %v208 = vpop.xlane.xlu0 %207
  %v209 = vmul.f32 %v206, %v206
  %210 = vadd.xlane.f32.xlu0 %v209
  %v211 = vpop.xlane.xlu0 %210
  %v212 = vmul.f32 %v208, 0.03125
  %v213 = vmul.f32 %v211, 0.03125
  %v214 = vmul.f32 %v212, %v212
  %v215 = vsub.f32 %v213, %v214
  %v216 = vmax.f32 %v215, 0.0
  %v217 = vadd.f32 %v216, 1e-05
  %v218 = vrsqrt.pop %v217
  %v219 = vmul.f32 %v218, %v217
  %v220 = vmul.f32 %v219, %v218
  %v221 = vmul.f32 0.5, %v220
  %v222 = vsub.f32 1.5, %v221
  %v223 = vmul.f32 %v218, %v222
  %vm224 = vweird.f32 %v217
  %vm225 = vweird.f32 %v218
  %vm226 = vmor %vm224, %vm225
  %v227 = vsel %vm226, %v218, %v223
  %v228 = vmul.f32 %v204, %v227
  %v229 = vmul.f32 %v212, %v228
  %v230 = vsub.f32 %v205, %v229
  %232 = vset.pattern.permute.xlu0 0
  %233 = vperm.xlu0 %232, %v228
  %v234 = vpop.permute.xlu0 %233
  %v236 = vmul.f32 %v203, %v234
  %238 = vset.pattern.permute.xlu0 0
  %239 = vperm.xlu0 %238, %v230
  %v240 = vpop.permute.xlu0 %239
  %v242 = vadd.f32 %v236, %v240
  %v243 = vmax.f32 %v242, 0.0
  %v244 = vsel %vm98, %v243, 0.0
  %v245 = vld [vmem:[%s7] sm:$0xff]
  %v246 = vld [vmem:[%s7 + $0x8] sm:$0xff]
  %v248 = vsel %vm59, %v245, 0
  %v251 = vsel %vm59, %v246, 0
  %253 = vmatpush.msra.mxu0 0.0
  %254 = vmatpush.msra.mxu0 0.0
  %255 = vmatpush.msra.mxu0 0.0
  %256 = vmatpush.msra.mxu0 0.0
  %257 = vmatpush.msra.mxu0 0.0
  %258 = vmatpush.msra.mxu0 0.0
  %259 = vmatpush.msra.mxu0 0.0
  %260 = vmatpush.msra.mxu0 0.0
  %261 = vmatpush.msra.mxu0 0.0
  %262 = vmatpush.msra.mxu0 0.0
  %263 = vmatpush.msra.mxu0 0.0
  %264 = vmatpush.msra.mxu0 0.0
  %265 = vmatpush.msra.mxu0 0.0
  %266 = vmatpush.msra.mxu0 0.0
  %267 = vmatpush.msra.mxu0 0.0
  %268 = vmatpush.msra.mxu0 %v244
  %269 = vmatmul.f32.gmra.mxu0 %v248
  %v270 = vpop.f32.mrf.mxu0
  %v271 = vadd.f32 0.0, %v270
  %272 = vmatmul.f32.gmra.mxu0 %v251
  %v273 = vpop.f32.mrf.mxu0
  %v274 = vadd.f32 0.0, %v273
  %275 = vdwg.mxu0
  %v276 = vld [vmem:[%s8] sm:$0xff]
  %v277 = vld [vmem:[%s8 + $0x8] sm:$0xff]
  %v278 = vld [vmem:[%s9] sm:$0xff]
  %v279 = vld [vmem:[%s9 + $0x8] sm:$0xff]
  %v280 = vsel %vm98, %v271, 0.0
  %v281 = vsel %vm98, %v274, 0.0
  %282 = vadd.xlane.f32.xlu0 %v280
  %v283 = vpop.xlane.xlu0 %282
  %284 = vadd.xlane.f32.xlu0 %v281
  %v285 = vpop.xlane.xlu0 %284
  %v286 = vmul.f32 %v280, %v280
  %v287 = vmul.f32 %v281, %v281
  %288 = vadd.xlane.f32.xlu0 %v286
  %v289 = vpop.xlane.xlu0 %288
  %290 = vadd.xlane.f32.xlu0 %v287
  %v291 = vpop.xlane.xlu0 %290
  %v292 = vmul.f32 %v283, 0.03125
  %v293 = vmul.f32 %v285, 0.03125
  %v294 = vmul.f32 %v289, 0.03125
  %v295 = vmul.f32 %v291, 0.03125
  %v296 = vmul.f32 %v292, %v292
  %v297 = vmul.f32 %v293, %v293
  %v298 = vsub.f32 %v294, %v296
  %v299 = vsub.f32 %v295, %v297
  %v300 = vmax.f32 %v298, 0.0
  %v301 = vmax.f32 %v299, 0.0
  %v302 = vadd.f32 %v300, 1e-05
  %v303 = vadd.f32 %v301, 1e-05
  %v304 = vrsqrt.pop %v302
  %v305 = vmul.f32 %v304, %v302
  %v306 = vmul.f32 %v305, %v304
  %v307 = vmul.f32 0.5, %v306
  %v308 = vsub.f32 1.5, %v307
  %v309 = vmul.f32 %v304, %v308
  %vm310 = vweird.f32 %v302
  %vm311 = vweird.f32 %v304
  %vm312 = vmor %vm310, %vm311
  %v313 = vsel %vm312, %v304, %v309
  %v314 = vrsqrt.pop %v303
  %v315 = vmul.f32 %v314, %v303
  %v316 = vmul.f32 %v315, %v314
  %v317 = vmul.f32 0.5, %v316
  %v318 = vsub.f32 1.5, %v317
  %v319 = vmul.f32 %v314, %v318
  %vm320 = vweird.f32 %v303
  %vm321 = vweird.f32 %v314
  %vm322 = vmor %vm320, %vm321
  %v323 = vsel %vm322, %v314, %v319
  %v324 = vmul.f32 %v276, %v313
  %v325 = vmul.f32 %v277, %v323
  %v326 = vmul.f32 %v292, %v324
  %v327 = vmul.f32 %v293, %v325
  %v328 = vsub.f32 %v278, %v326
  %v329 = vsub.f32 %v279, %v327
  %331 = vset.pattern.permute.xlu0 0
  %332 = vperm.xlu0 %331, %v324
  %v333 = vpop.permute.xlu0 %332
  %336 = vset.pattern.permute.xlu0 0
  %337 = vperm.xlu0 %336, %v325
  %v338 = vpop.permute.xlu0 %337
  %v340 = vmul.f32 %v271, %v333
  %v341 = vmul.f32 %v274, %v338
  %343 = vset.pattern.permute.xlu0 0
  %344 = vperm.xlu0 %343, %v328
  %v345 = vpop.permute.xlu0 %344
  %348 = vset.pattern.permute.xlu0 0
  %349 = vperm.xlu0 %348, %v329
  %v350 = vpop.permute.xlu0 %349
  %v352 = vadd.f32 %v340, %v345
  %v353 = vadd.f32 %v341, %v350
  %v354 = vmax.f32 %v352, 0.0
  %v355 = vmax.f32 %v353, 0.0
  %v356 = vsel %vm98, %v354, 0.0
  %v357 = vsel %vm98, %v355, 0.0
  %v358 = vld [vmem:[%s11] sm:$0xff]
  %v359 = vld [vmem:[%s11 + $0x8] sm:$0xff]
  %v360 = vadd.f32 %v358, %v356
  %v361 = vadd.f32 %v359, %v357
  %362 = vst [vmem:[%s11] sm:$0xff] %v360
  %363 = vst [vmem:[%s11 + $0x8] sm:$0xff] %v361
  // Predicated region
  $region46: #{bottleneck_forward.1} parent=0 // pred_check
    _
  $region47: #{bottleneck_forward.1} parent=0 // pred_check_branch
    %365 = sbr.rel (0) target = $region49
  $region48: #{bottleneck_forward.1} parent=0 // pred_region
    _
  $region49: #{bottleneck_forward.1} parent=0 // pred_fallthru
    _
  // Predicated region
  $region50: #{bottleneck_forward.1} parent=0 // pred_check
    _
  $region51: #{bottleneck_forward.1} parent=0 // pred_check_branch
    %367 = sbr.rel (0) target = $region53
  $region52: #{bottleneck_forward.1} parent=0 // pred_region
    _
  $region53: #{bottleneck_forward.1} parent=0 // pred_fallthru
    _

</llo_original>
